<compile_context>
chip_gen: v7x
topology: tpu7x:2x2x1
jax: 0.10.0
libtpu: 0.0.40
codegen_flags: <defaults>
</compile_context>

<pallas_src>
import jax
import jax.numpy as jnp
from jax import lax
from jax.experimental import pallas as pl
from jax.experimental.pallas import tpu as pltpu


def fixed_mlp_kernel(x_ref, w_ref, b_ref, o_ref):
    x = x_ref[...]            # (40, TN)  — TN evaluations, one per lane
    w1 = w_ref[0]             # (40, 40)  block-diag of (RW^T @ W)   [fused linear+rand]
    w2 = w_ref[1]             # (40, 40)  block-diag of W            [second linear]
    b1 = b_ref[0]             # (40, 1)   tiled (RW^T @ b + 1)
    b2 = b_ref[1]             # (40, 1)   tiled b

    # X = relu(linear(X) @ rand_weight + 1)   — one stacked MXU dot over the chunk
    h = jnp.maximum(jnp.dot(w1, x, preferred_element_type=jnp.float32) + b1, 0.0)
    # X = linear(X)  (same weights reused)
    h = jnp.dot(w2, h, preferred_element_type=jnp.float32) + b2

    # Per-evaluation reductions: one sublane reduce over the whole chunk.
    abs_sum = jnp.sum(jnp.abs(h), axis=0, keepdims=True)   # (1, TN)
    tot = jnp.sum(h, axis=0, keepdims=True)                # (1, TN)

    # while X.abs().sum() > 1: X /= 2
    # Halving all elements k times scales both sums by exactly 2^-k, so
    #   n = ceil(log2(abs_sum))  if abs_sum > 1 else 0
    # computed exactly from the fp32 exponent/mantissa (mant == 0 <=> exact power
    # of two), and the final scale 2^-n is assembled bit-exactly from its
    # exponent field.  Pure VPU bit math on a lane-dense (1, TN) vector.
    bits = pltpu.bitcast(abs_sum, jnp.int32)
    exp_unbiased = ((bits >> 23) & 0xFF) - 127
    mant = bits & 0x7FFFFF
    n = jnp.where(mant == 0, exp_unbiased, exp_unbiased + 1)   # ceil(log2(abs_sum))
    n = jnp.where(abs_sum > 1.0, n, 0)
    # TODO(synk): non-finite or >~2^127 abs_sum is clamped here; the PyTorch
    # reference would loop forever / keep halving — unreachable for this module.
    n = jnp.clip(n, 0, 126)
    scale = pltpu.bitcast((127 - n) << 23, jnp.float32)        # == 2.0 ** -n, exact

    o_ref[...] = tot * scale                                   # (1, TN) dense store


def _round_up(x, m):
    return -(-x // m) * m


def _block_diag(a, n_blocks):
    f = a.shape[0]
    out = jnp.zeros((n_blocks * f, n_blocks * f), a.dtype)
    for i in range(n_blocks):
        out = out.at[i * f:(i + 1) * f, i * f:(i + 1) * f].set(a)
    return out


def prepare_params(linear_w, linear_b, rand_w, n_rows=2):
    """One-time parameter prep (hoisted out of the hot path).

    Column form of one evaluation (x_col is one 20-row column per input row):
      y = relu(A1 @ x_col + c1),  A1 = RW^T @ W,  c1 = RW^T @ b + 1
      z = A2 @ y     + c2,        A2 = W,         c2 = b
    Both rows of an evaluation are handled at once via (2*20, 2*20) block-diagonal
    matrices (exact: the off-diagonal zero contributions add exact zeros)."""
    w = jnp.asarray(linear_w, jnp.float32)          # (20, 20)
    b = jnp.asarray(linear_b, jnp.float32)          # (20,)
    rw = jnp.asarray(rand_w, jnp.float32)           # (20, 20)

    a1 = rw.T @ w
    c1 = rw.T @ b + 1.0
    a2 = w
    c2 = b

    w_big = jnp.stack([_block_diag(a1, n_rows), _block_diag(a2, n_rows)])   # (2, 40, 40)
    b_big = jnp.stack([jnp.tile(c1, n_rows)[:, None],
                       jnp.tile(c2, n_rows)[:, None]])                      # (2, 40, 1)
    return w_big, b_big


def fixed_hidden_mlp(xs, w_big, b_big, *, max_tn=512):
    """xs: (N, 2, 20) — N independent evaluations of the module in ONE pallas_call.
    Returns (N,) f32, one module output (scalar X.sum()) per evaluation."""
    N = xs.shape[0]
    bf = xs.shape[1] * xs.shape[2]                   # 40 rows per column

    # Lane-major layout: one evaluation per lane, padded to a lane-tile multiple.
    x_col = xs.reshape(N, bf).astype(jnp.float32).T  # (40, N)
    tn = min(max_tn, _round_up(N, 128))              # chunk width (multiple of 128)
    n_pad = _round_up(N, tn)
    if n_pad > N:
        x_col = jnp.pad(x_col, ((0, 0), (0, n_pad - N)))   # padded evals are discarded
    num_chunks = n_pad // tn

    out = pl.pallas_call(
        fixed_mlp_kernel,
        out_shape=jax.ShapeDtypeStruct((1, n_pad), jnp.float32),
        grid=(num_chunks,),
        in_specs=[
            pl.BlockSpec((bf, tn), lambda i: (0, i)),        # per-chunk inputs
            pl.BlockSpec((2, bf, bf), lambda i: (0, 0, 0)),  # fused weights (resident)
            pl.BlockSpec((2, bf, 1), lambda i: (0, 0, 0)),   # fused biases  (resident)
        ],
        out_specs=pl.BlockSpec((1, tn), lambda i: (0, i)),   # lane-dense result row
        compiler_params=pltpu.CompilerParams(
            dimension_semantics=("parallel",)),              # v7x: chunks across both TCs
    )(x_col, w_big, b_big)
    return out[0, :N]


def reference_one(x, linear_w, linear_b, rand_w):
    """Unfused PyTorch-semantics reference for one (2, 20) input."""
    h = x @ linear_w.T + linear_b
    h = jnp.maximum(h @ rand_w + 1.0, 0.0)
    h = h @ linear_w.T + linear_b
    h = lax.while_loop(lambda v: jnp.sum(jnp.abs(v)) > 1.0, lambda v: v / 2.0, h)
    return jnp.sum(h)


if __name__ == "__main__":
    key = jax.random.PRNGKey(0)
    k_x, k_w, k_b, k_rw, k_x2 = jax.random.split(key, 5)

    B, F = 2, 20                 # module shapes: torch.rand(2, 20), Linear(20, 20)
    rand_w = jax.random.uniform(k_rw, (F, F), dtype=jnp.float32)      # torch.rand((20, 20))
    bound = 1.0 / (F ** 0.5)                                          # nn.Linear default init
    linear_w = jax.random.uniform(k_w, (F, F), jnp.float32, -bound, bound)
    linear_b = jax.random.uniform(k_b, (F,), jnp.float32, -bound, bound)

    # One-time prep (fuse / block-diag / cast) — not in the hot path.
    w_big, b_big = prepare_params(linear_w, linear_b, rand_w, n_rows=B)

    ref_fn = jax.vmap(lambda x: reference_one(x, linear_w, linear_b, rand_w))

    # Small case (matches the module spec): N=8 evaluations -> one 128-lane chunk.
    xs = jax.random.uniform(k_x, (8, B, F), dtype=jnp.float32)
    out = jax.block_until_ready(fixed_hidden_mlp(xs, w_big, b_big))
    ref = ref_fn(xs)
    # Loose tolerance only because the fused / block-diagonal dots reorder fp32
    # rounding vs the unfused reference; the halving/scaling step itself is exact.
    assert out.shape == (8,)
    assert jnp.allclose(out, ref, rtol=1e-4, atol=1e-4), (out, ref)

    # Larger case: exercises padding + the multi-chunk parallel grid (2 steps of 512).
    xs2 = jax.random.uniform(k_x2, (600, B, F), dtype=jnp.float32)
    out2 = jax.block_until_ready(fixed_hidden_mlp(xs2, w_big, b_big))
    ref2 = ref_fn(xs2)
    assert jnp.allclose(out2, ref2, rtol=1e-4, atol=1e-4), (out2, ref2)

    print("KERNEL_OK")
</pallas_src>

<mosaic_0001>
module attributes {stable_mosaic.version = 11 : i64} {
  func.func @fixed_mlp_kernel(%arg0: i32, %arg1: memref<40x128xf32, #tpu.memory_space<vmem>>, %arg2: memref<2x40x40xf32, #tpu.memory_space<vmem>>, %arg3: memref<2x40x1xf32, #tpu.memory_space<vmem>>, %arg4: memref<1x128xf32, #tpu.memory_space<vmem>>) attributes {dimension_semantics = [#tpu.dimension_semantics<parallel>], iteration_bounds = array<i64: 1>, scalar_prefetch = 0 : i64, scratch_operands = 0 : i64, tpu.core_type = #tpu.core_type<tc>, window_params = [{transform_indices = @transform_0, window_bounds = array<i64: 40, 128>}, {pipeline_mode = #tpu.pipeline_mode<synchronous>, transform_indices = @transform_1, window_bounds = array<i64: 2, 40, 40>}, {pipeline_mode = #tpu.pipeline_mode<synchronous>, transform_indices = @transform_2, window_bounds = array<i64: 2, 40, 1>}, {transform_indices = @transform_3, window_bounds = array<i64: 1, 128>}]} {
    %c0 = arith.constant 0 : index
    %c0_0 = arith.constant 0 : index
    %0 = vector.load %arg1[%c0, %c0_0] : memref<40x128xf32, #tpu.memory_space<vmem>>, vector<40x128xf32>
    %c0_1 = arith.constant 0 : index
    %c0_2 = arith.constant 0 : index
    %c0_3 = arith.constant 0 : index
    %1 = vector.load %arg2[%c0_1, %c0_2, %c0_3] : memref<2x40x40xf32, #tpu.memory_space<vmem>>, vector<1x40x40xf32>
    %2 = vector.shape_cast %1 : vector<1x40x40xf32> to vector<40x40xf32>
    %c1 = arith.constant 1 : index
    %c0_4 = arith.constant 0 : index
    %c0_5 = arith.constant 0 : index
    %3 = vector.load %arg2[%c1, %c0_4, %c0_5] : memref<2x40x40xf32, #tpu.memory_space<vmem>>, vector<1x40x40xf32>
    %4 = vector.shape_cast %3 : vector<1x40x40xf32> to vector<40x40xf32>
    %c0_6 = arith.constant 0 : index
    %c0_7 = arith.constant 0 : index
    %c0_8 = arith.constant 0 : index
    %5 = vector.load %arg3[%c0_6, %c0_7, %c0_8] : memref<2x40x1xf32, #tpu.memory_space<vmem>>, vector<1x40x1xf32>
    %6 = vector.shape_cast %5 : vector<1x40x1xf32> to vector<40x1xf32>
    %c1_9 = arith.constant 1 : index
    %c0_10 = arith.constant 0 : index
    %c0_11 = arith.constant 0 : index
    %7 = vector.load %arg3[%c1_9, %c0_10, %c0_11] : memref<2x40x1xf32, #tpu.memory_space<vmem>>, vector<1x40x1xf32>
    %8 = vector.shape_cast %7 : vector<1x40x1xf32> to vector<40x1xf32>
    %cst = arith.constant dense<0.000000e+00> : vector<40x128xf32>
    %9 = tpu.matmul %2, %0, %cst {dimension_numbers = #tpu.dot_dimension_numbers<[1], [0], [0], [1], [0, 0, 1, 1], [], []>} : vector<40x40xf32>, vector<40x128xf32>, vector<40x128xf32> -> vector<40x128xf32>
    %10 = vector.broadcast %6 : vector<40x1xf32> to vector<40x128xf32>
    %11 = arith.addf %9, %10 : vector<40x128xf32>
    %cst_12 = arith.constant 0.000000e+00 : f32
    %12 = vector.broadcast %cst_12 : f32 to vector<40x128xf32>
    %13 = arith.maximumf %11, %12 : vector<40x128xf32>
    %cst_13 = arith.constant dense<0.000000e+00> : vector<40x128xf32>
    %14 = tpu.matmul %4, %13, %cst_13 {dimension_numbers = #tpu.dot_dimension_numbers<[1], [0], [0], [1], [0, 0, 1, 1], [], []>} : vector<40x40xf32>, vector<40x128xf32>, vector<40x128xf32> -> vector<40x128xf32>
    %15 = vector.broadcast %8 : vector<40x1xf32> to vector<40x128xf32>
    %16 = arith.addf %14, %15 : vector<40x128xf32>
    %17 = math.absf %16 : vector<40x128xf32>
    %cst_14 = arith.constant dense<0.000000e+00> : vector<128xf32>
    %18 = vector.multi_reduction <add>, %17, %cst_14 [0] : vector<40x128xf32> to vector<128xf32>
    %19 = vector.shape_cast %18 : vector<128xf32> to vector<1x128xf32>
    %cst_15 = arith.constant dense<0.000000e+00> : vector<128xf32>
    %20 = vector.multi_reduction <add>, %16, %cst_15 [0] : vector<40x128xf32> to vector<128xf32>
    %21 = vector.shape_cast %20 : vector<128xf32> to vector<1x128xf32>
    %22 = tpu.bitcast %19 : vector<1x128xf32> -> vector<1x128xi32>
    %c23_i32 = arith.constant 23 : i32
    %23 = vector.broadcast %c23_i32 : i32 to vector<1x128xi32>
    %24 = arith.shrsi %22, %23 : vector<1x128xi32>
    %c255_i32 = arith.constant 255 : i32
    %25 = vector.broadcast %c255_i32 : i32 to vector<1x128xi32>
    %26 = arith.andi %24, %25 : vector<1x128xi32>
    %c127_i32 = arith.constant 127 : i32
    %27 = vector.broadcast %c127_i32 : i32 to vector<1x128xi32>
    %28 = arith.subi %26, %27 : vector<1x128xi32>
    %c8388607_i32 = arith.constant 8388607 : i32
    %29 = vector.broadcast %c8388607_i32 : i32 to vector<1x128xi32>
    %30 = arith.andi %22, %29 : vector<1x128xi32>
    %c0_i32 = arith.constant 0 : i32
    %31 = vector.broadcast %c0_i32 : i32 to vector<1x128xi32>
    %32 = arith.cmpi eq, %30, %31 : vector<1x128xi32>
    %c1_i32 = arith.constant 1 : i32
    %33 = vector.broadcast %c1_i32 : i32 to vector<1x128xi32>
    %34 = arith.addi %28, %33 : vector<1x128xi32>
    %35 = arith.select %32, %28, %34 : vector<1x128xi1>, vector<1x128xi32>
    %cst_16 = arith.constant 1.000000e+00 : f32
    %36 = vector.broadcast %cst_16 : f32 to vector<1x128xf32>
    %37 = arith.cmpf ogt, %19, %36 : vector<1x128xf32>
    %c0_i32_17 = arith.constant 0 : i32
    %38 = vector.broadcast %c0_i32_17 : i32 to vector<1x128xi32>
    %39 = arith.select %37, %35, %38 : vector<1x128xi1>, vector<1x128xi32>
    %c0_i32_18 = arith.constant 0 : i32
    %c126_i32 = arith.constant 126 : i32
    %40 = vector.broadcast %c0_i32_18 : i32 to vector<1x128xi32>
    %41 = arith.maxsi %40, %39 : vector<1x128xi32>
    %42 = vector.broadcast %c126_i32 : i32 to vector<1x128xi32>
    %43 = arith.minsi %42, %41 : vector<1x128xi32>
    %c127_i32_19 = arith.constant 127 : i32
    %44 = vector.broadcast %c127_i32_19 : i32 to vector<1x128xi32>
    %45 = arith.subi %44, %43 : vector<1x128xi32>
    %c23_i32_20 = arith.constant 23 : i32
    %46 = vector.broadcast %c23_i32_20 : i32 to vector<1x128xi32>
    %47 = arith.shli %45, %46 : vector<1x128xi32>
    %48 = tpu.bitcast %47 : vector<1x128xi32> -> vector<1x128xf32>
    %49 = arith.mulf %21, %48 : vector<1x128xf32>
    %c0_21 = arith.constant 0 : index
    %c0_22 = arith.constant 0 : index
    %50 = vector.load %arg4[%c0_21, %c0_22] : memref<1x128xf32, #tpu.memory_space<vmem>>, vector<1x128xf32>
    tpu.vector_store %arg4[%c0_21, %c0_22], %49 {strides = array<i32>} : memref<1x128xf32, #tpu.memory_space<vmem>>, vector<1x128xf32>,
    return
  }
  func.func @transform_0(%arg0: i32) -> (i32, i32) {
    %c0_i32 = arith.constant 0 : i32
    %c0_i32_0 = arith.constant 0 : i32
    return %c0_i32, %arg0 : i32, i32
  }
  func.func @transform_1(%arg0: i32) -> (i32, i32, i32) {
    %c0_i32 = arith.constant 0 : i32
    %c0_i32_0 = arith.constant 0 : i32
    %c0_i32_1 = arith.constant 0 : i32
    %c0_i32_2 = arith.constant 0 : i32
    return %c0_i32, %c0_i32_0, %c0_i32_1 : i32, i32, i32
  }
  func.func @transform_2(%arg0: i32) -> (i32, i32, i32) {
    %c0_i32 = arith.constant 0 : i32
    %c0_i32_0 = arith.constant 0 : i32
    %c0_i32_1 = arith.constant 0 : i32
    %c0_i32_2 = arith.constant 0 : i32
    return %c0_i32, %c0_i32_0, %c0_i32_1 : i32, i32, i32
  }
  func.func @transform_3(%arg0: i32) -> (i32, i32) {
    %c0_i32 = arith.constant 0 : i32
    %c0_i32_0 = arith.constant 0 : i32
    return %c0_i32, %arg0 : i32, i32
  }
}

</mosaic_0001>

<llo_original>
// kernel: tpu_custom_call.1
$region0: #{tpu_custom_call.1}
  #allocation0 [shape = 'u32[]', space=smem, size = 0x4, offset = 0x4, fixed_abs, tag = 'smem constant byte address 0x4 - core index']
  #allocation1 [shape = 'u32[144,128]{1,0:T(1,128)}', space=vmem, size = 0x12000, scoped, tag = 'internal scratch']
  %s0 = inlined_call_operand.hbm [shape: f32[40,128], index: 0, kind: input, shape index: {}]
  %s1 = inlined_call_operand.vmem [shape: f32[2,40,40], index: 1, kind: input, shape index: {}]
  %s2 = inlined_call_operand.vmem [shape: f32[2,40,1], index: 2, kind: input, shape index: {}]
  %s3 = inlined_call_operand.hbm [shape: f32[1,128], index: 3, kind: output, shape index: {}]
  %s4 = sld [smem:[#allocation0]]
  $region26: #{tpu_custom_call.1} parent=0
    _
  %s6 = ssub.s32 1, %s4
  %s7 = scalar_select 0, %s6, %s4
  $region1: #{tpu_custom_call.1} parent=0
    #allocation2 [shape = 'u8[20480]{0}', space=vmem, size = 0x5000, scoped, tag = 'input window, operand 0, single buffered']
    #allocation3 [shape = 's32[1]{0}', space=sflag, size = 0x4, scoped, tag = 'scoped memory for tpu_custom_call.1']
    #allocation4 [shape = 's32[1]{0}', space=sflag, size = 0x4, scoped, tag = 'scoped memory for tpu_custom_call.1']
    #allocation5 [shape = 'u8[512]{0}', space=vmem, size = 0x400, scoped, tag = 'output window, operand 0, single buffered']
    %8 = vsyncpa [#allocation3], 0
    %9 = vsyncpa [#allocation4], 0
    // Predicated region
    $region2: #{tpu_custom_call.1} parent=1 // pred_check
      _
    $region3: #{tpu_custom_call.1} parent=1 // pred_check_branch
      %11 = sbr.rel (0) target = $region5
    $region4: #{tpu_custom_call.1} parent=1 // pred_region
      %s13 = ssub.s32 640, 640
      %14 = vsyncadd [#allocation3], %s13
      %s15 = sshll.u32 [#allocation2], 4
      %s16 = int_to_ptr.vmem [resolvable:$true] %s15
      %21 = dma.hbm_to_vmem [thread:$0]  %s0, 640, %s16, [#allocation3], 128, 128, 8
    $region5: #{tpu_custom_call.1} parent=1 // pred_fallthru
      _
    // Predicated region
    $region6: #{tpu_custom_call.1} parent=1 // pred_check
      _
    $region7: #{tpu_custom_call.1} parent=1 // pred_check_branch
      %23 = sbr.rel (0) target = $region9
    $region8: #{tpu_custom_call.1} parent=1 // pred_region
      _
    $region9: #{tpu_custom_call.1} parent=1 // pred_fallthru
      _
    // Predicated region
    $region10: #{tpu_custom_call.1} parent=1 // pred_check
      _
    $region11: #{tpu_custom_call.1} parent=1 // pred_check_branch
      %25 = sbr.rel (0) target = $region13
    $region12: #{tpu_custom_call.1} parent=1 // pred_region
      _
    $region13: #{tpu_custom_call.1} parent=1 // pred_fallthru
      _
    // Predicated region
    $region14: #{tpu_custom_call.1} parent=1 // pred_check
      _
    $region15: #{tpu_custom_call.1} parent=1 // pred_check_branch
      %27 = sbr.rel (0) target = $region17
    $region16: #{tpu_custom_call.1} parent=1 // pred_region
      %28 = dma.done [#allocation3], 640
    $region17: #{tpu_custom_call.1} parent=1 // pred_fallthru
      _
    %v29 = vld [vmem:[#allocation2] sm:$0xff]
    %v30 = vld [vmem:[#allocation2 + $0x8] sm:$0xff]
    %v31 = vld [vmem:[#allocation2 + $0x10] sm:$0xff]
    %v32 = vld [vmem:[#allocation2 + $0x18] sm:$0xff]
    %v33 = vld [vmem:[#allocation2 + $0x20] sm:$0xff]
    %v34 = vld [vmem:[%s1] sm:$0xff]
    %v35 = vld [vmem:[%s1 + $0x8] sm:$0xff]
    %v36 = vld [vmem:[%s1 + $0x10] sm:$0xff]
    %v37 = vld [vmem:[%s1 + $0x18] sm:$0xff]
    %v38 = vld [vmem:[%s1 + $0x20] sm:$0xff]
    %s39 = scalar_lea.vmem %s1, 40
    %v40 = vld [vmem:[%s39] sm:$0xff]
    %v41 = vld [vmem:[%s39 + $0x8] sm:$0xff]
    %v42 = vld [vmem:[%s39 + $0x10] sm:$0xff]
    %v43 = vld [vmem:[%s39 + $0x18] sm:$0xff]
    %v44 = vld [vmem:[%s39 + $0x20] sm:$0xff]
    %v45 = vld [vmem:[%s2] sm:$0xff]
    %v46 = vld [vmem:[%s2 + $0x8] sm:$0xff]
    %v47 = vld [vmem:[%s2 + $0x10] sm:$0xff]
    %v48 = vld [vmem:[%s2 + $0x18] sm:$0xff]
    %v49 = vld [vmem:[%s2 + $0x20] sm:$0xff]
    %s50 = scalar_lea.vmem %s2, 40
    %v51 = vld [vmem:[%s50] sm:$0xff]
    %v52 = vld [vmem:[%s50 + $0x8] sm:$0xff]
    %v53 = vld [vmem:[%s50 + $0x10] sm:$0xff]
    %v54 = vld [vmem:[%s50 + $0x18] sm:$0xff]
    %v55 = vld [vmem:[%s50 + $0x20] sm:$0xff]
    %57 = vset.pattern.permute.xlu0 0
    %58 = vperm.xlu0 %57, %v45
    %v59 = vpop.permute.xlu0 %58
    %62 = vset.pattern.permute.xlu0 0
    %63 = vperm.xlu0 %62, %v46
    %v64 = vpop.permute.xlu0 %63
    %67 = vset.pattern.permute.xlu0 0
    %68 = vperm.xlu0 %67, %v47
    %v69 = vpop.permute.xlu0 %68
    %72 = vset.pattern.permute.xlu0 0
    %73 = vperm.xlu0 %72, %v48
    %v74 = vpop.permute.xlu0 %73
    %77 = vset.pattern.permute.xlu0 0
    %78 = vperm.xlu0 %77, %v49
    %v79 = vpop.permute.xlu0 %78
    %vm81 = vcmask 326656
    %v83 = vsel %vm81, %v34, 0
    %v86 = vsel %vm81, %v35, 0
    %v89 = vsel %vm81, %v36, 0
    %v92 = vsel %vm81, %v37, 0
    %v95 = vsel %vm81, %v38, 0
    %97 = vmatprep.subr.mxu0 0.0
    %98 = vmatpush1.msra.mxu0 %v29
    %99 = vmatprep.subr.mxu0 0.0
    %100 = vmatpush1.msra.mxu0 %v30
    %101 = vmatprep.subr.mxu0 0.0
    %102 = vmatpush1.msra.mxu0 %v31
    %103 = vmatprep.subr.mxu0 0.0
    %104 = vmatpush1.msra.mxu0 %v32
    %105 = vmatprep.subr.mxu0 0.0
    %106 = vmatpush1.msra.mxu0 %v33
    %107 = vmatprep.subr.mxu0 0.0
    %108 = vmatpush1.msra.mxu0 0.0
    %109 = vmatprep.subr.mxu0 0.0
    %110 = vmatpush1.msra.mxu0 0.0
    %111 = vmatprep.subr.mxu0 0.0
    %112 = vmatpush1.msra.mxu0 0.0
    %113 = vmatprep.subr.mxu0 0.0
    %114 = vmatpush1.msra.mxu0 0.0
    %115 = vmatprep.subr.mxu0 0.0
    %116 = vmatpush1.msra.mxu0 0.0
    %117 = vmatprep.subr.mxu0 0.0
    %118 = vmatpush1.msra.mxu0 0.0
    %119 = vmatprep.subr.mxu0 0.0
    %120 = vmatpush1.msra.mxu0 0.0
    %121 = vmatprep.subr.mxu0 0.0
    %122 = vmatpush1.msra.mxu0 0.0
    %123 = vmatprep.subr.mxu0 0.0
    %124 = vmatpush1.msra.mxu0 0.0
    %125 = vmatprep.subr.mxu0 0.0
    %126 = vmatpush1.msra.mxu0 0.0
    %127 = vmatprep.subr.mxu0 0.0
    %128 = vmatpush1.msra.mxu0 0.0
    %129 = vmatprep.subr.mxu0 0.0
    %130 = vmatpush1.msra.mxu0 0.0
    %131 = vmatprep.subr.mxu0 0.0
    %132 = vmatpush1.msra.mxu0 0.0
    %133 = vmatprep.subr.mxu0 0.0
    %134 = vmatpush1.msra.mxu0 0.0
    %135 = vmatprep.subr.mxu0 0.0
    %136 = vmatpush1.msra.mxu0 0.0
    %137 = vmatprep.subr.mxu0 0.0
    %138 = vmatpush1.msra.mxu0 0.0
    %139 = vmatprep.subr.mxu0 0.0
    %140 = vmatpush1.msra.mxu0 0.0
    %141 = vmatprep.subr.mxu0 0.0
    %142 = vmatpush1.msra.mxu0 0.0
    %143 = vmatprep.subr.mxu0 0.0
    %144 = vmatpush1.msra.mxu0 0.0
    %145 = vmatprep.subr.mxu0 0.0
    %146 = vmatpush1.msra.mxu0 0.0
    %147 = vmatprep.subr.mxu0 0.0
    %148 = vmatpush1.msra.mxu0 0.0
    %149 = vmatprep.subr.mxu0 0.0
    %150 = vmatpush1.msra.mxu0 0.0
    %151 = vmatprep.subr.mxu0 0.0
    %152 = vmatpush1.msra.mxu0 0.0
    %153 = vmatprep.subr.mxu0 0.0
    %154 = vmatpush1.msra.mxu0 0.0
    %155 = vmatprep.subr.mxu0 0.0
    %156 = vmatpush1.msra.mxu0 0.0
    %157 = vmatprep.subr.mxu0 0.0
    %158 = vmatpush1.msra.mxu0 0.0
    %159 = vmatprep.subr.mxu0 0.0
    %160 = vmatpush1.msra.mxu0 0.0
    %161 = vmatprep.mubr.f32.mxu0 0.0
    %162 = vmatmul.mubr.f32.gmra.mrb[0].mxu0 %v83
    %v163 = vpop.f32.mrb[0].mxu0
    %v164 = vadd.f32 %v59, %v163
    %v165 = vpop.f32.mrb[0].mxu0
    %166 = vmatprep.mubr.f32.mxu0 0.0
    %167 = vmatmul.mubr.f32.gmra.mrb[0].mxu0 %v86
    %v168 = vpop.f32.mrb[0].mxu0
    %v169 = vadd.f32 %v64, %v168
    %v170 = vpop.f32.mrb[0].mxu0
    %171 = vmatprep.mubr.f32.mxu0 0.0
    %172 = vmatmul.mubr.f32.gmra.mrb[0].mxu0 %v89
    %v173 = vpop.f32.mrb[0].mxu0
    %v174 = vadd.f32 %v69, %v173
    %v175 = vpop.f32.mrb[0].mxu0
    %176 = vmatprep.mubr.f32.mxu0 0.0
    %177 = vmatmul.mubr.f32.gmra.mrb[0].mxu0 %v92
    %v178 = vpop.f32.mrb[0].mxu0
    %v179 = vadd.f32 %v74, %v178
    %v180 = vpop.f32.mrb[0].mxu0
    %181 = vmatprep.mubr.f32.mxu0 0.0
    %182 = vmatmul.mubr.f32.gmra.mrb[0].mxu0 %v95
    %v183 = vpop.f32.mrb[0].mxu0
    %v184 = vadd.f32 %v79, %v183
    %v185 = vpop.f32.mrb[0].mxu0
    %186 = vdwg.mxu0
    %v187 = vmax.f32 %v164, 0.0
    %v188 = vmax.f32 %v169, 0.0
    %v189 = vmax.f32 %v174, 0.0
    %v190 = vmax.f32 %v179, 0.0
    %v191 = vmax.f32 %v184, 0.0
    %193 = vset.pattern.permute.xlu0 0
    %194 = vperm.xlu0 %193, %v51
    %v195 = vpop.permute.xlu0 %194
    %198 = vset.pattern.permute.xlu0 0
    %199 = vperm.xlu0 %198, %v52
    %v200 = vpop.permute.xlu0 %199
    %203 = vset.pattern.permute.xlu0 0
    %204 = vperm.xlu0 %203, %v53
    %v205 = vpop.permute.xlu0 %204
    %208 = vset.pattern.permute.xlu0 0
    %209 = vperm.xlu0 %208, %v54
    %v210 = vpop.permute.xlu0 %209
    %213 = vset.pattern.permute.xlu0 0
    %214 = vperm.xlu0 %213, %v55
    %v215 = vpop.permute.xlu0 %214
    %v218 = vsel %vm81, %v40, 0
    %v221 = vsel %vm81, %v41, 0
    %v224 = vsel %vm81, %v42, 0
    %v227 = vsel %vm81, %v43, 0
    %v230 = vsel %vm81, %v44, 0
    %232 = vmatprep.subr.mxu0 0.0
    %233 = vmatpush1.msra.mxu0 %v187
    %234 = vmatprep.subr.mxu0 0.0
    %235 = vmatpush1.msra.mxu0 %v188
    %236 = vmatprep.subr.mxu0 0.0
    %237 = vmatpush1.msra.mxu0 %v189
    %238 = vmatprep.subr.mxu0 0.0
    %239 = vmatpush1.msra.mxu0 %v190
    %240 = vmatprep.subr.mxu0 0.0
    %241 = vmatpush1.msra.mxu0 %v191
    %242 = vmatprep.subr.mxu0 0.0
    %243 = vmatpush1.msra.mxu0 0.0
    %244 = vmatprep.subr.mxu0 0.0
    %245 = vmatpush1.msra.mxu0 0.0
    %246 = vmatprep.subr.mxu0 0.0
    %247 = vmatpush1.msra.mxu0 0.0
    %248 = vmatprep.subr.mxu0 0.0
    %249 = vmatpush1.msra.mxu0 0.0
    %250 = vmatprep.subr.mxu0 0.0
    %251 = vmatpush1.msra.mxu0 0.0
    %252 = vmatprep.subr.mxu0 0.0
    %253 = vmatpush1.msra.mxu0 0.0
    %254 = vmatprep.subr.mxu0 0.0
    %255 = vmatpush1.msra.mxu0 0.0
    %256 = vmatprep.subr.mxu0 0.0
    %257 = vmatpush1.msra.mxu0 0.0
    %258 = vmatprep.subr.mxu0 0.0
    %259 = vmatpush1.msra.mxu0 0.0
    %260 = vmatprep.subr.mxu0 0.0
    %261 = vmatpush1.msra.mxu0 0.0
    %262 = vmatprep.subr.mxu0 0.0
    %263 = vmatpush1.msra.mxu0 0.0
    %264 = vmatprep.subr.mxu0 0.0
    %265 = vmatpush1.msra.mxu0 0.0
    %266 = vmatprep.subr.mxu0 0.0
    %267 = vmatpush1.msra.mxu0 0.0
    %268 = vmatprep.subr.mxu0 0.0
    %269 = vmatpush1.msra.mxu0 0.0
    %270 = vmatprep.subr.mxu0 0.0
    %271 = vmatpush1.msra.mxu0 0.0
    %272 = vmatprep.subr.mxu0 0.0
    %273 = vmatpush1.msra.mxu0 0.0
    %274 = vmatprep.subr.mxu0 0.0
    %275 = vmatpush1.msra.mxu0 0.0
    %276 = vmatprep.subr.mxu0 0.0
    %277 = vmatpush1.msra.mxu0 0.0
    %278 = vmatprep.subr.mxu0 0.0
    %279 = vmatpush1.msra.mxu0 0.0
    %280 = vmatprep.subr.mxu0 0.0
    %281 = vmatpush1.msra.mxu0 0.0
    %282 = vmatprep.subr.mxu0 0.0
    %283 = vmatpush1.msra.mxu0 0.0
    %284 = vmatprep.subr.mxu0 0.0
    %285 = vmatpush1.msra.mxu0 0.0
    %286 = vmatprep.subr.mxu0 0.0
    %287 = vmatpush1.msra.mxu0 0.0
    %288 = vmatprep.subr.mxu0 0.0
    %289 = vmatpush1.msra.mxu0 0.0
    %290 = vmatprep.subr.mxu0 0.0
    %291 = vmatpush1.msra.mxu0 0.0
    %292 = vmatprep.subr.mxu0 0.0
    %293 = vmatpush1.msra.mxu0 0.0
    %294 = vmatprep.subr.mxu0 0.0
    %295 = vmatpush1.msra.mxu0 0.0
    %296 = vmatprep.mubr.f32.mxu0 0.0
    %297 = vmatmul.mubr.f32.gmra.mrb[0].mxu0 %v218
    %v298 = vpop.f32.mrb[0].mxu0
    %v299 = vadd.f32 %v195, %v298
    %v300 = vpop.f32.mrb[0].mxu0
    %301 = vmatprep.mubr.f32.mxu0 0.0
    %302 = vmatmul.mubr.f32.gmra.mrb[0].mxu0 %v221
    %v303 = vpop.f32.mrb[0].mxu0
    %v304 = vadd.f32 %v200, %v303
    %v305 = vpop.f32.mrb[0].mxu0
    %306 = vmatprep.mubr.f32.mxu0 0.0
    %307 = vmatmul.mubr.f32.gmra.mrb[0].mxu0 %v224
    %v308 = vpop.f32.mrb[0].mxu0
    %v309 = vadd.f32 %v205, %v308
    %v310 = vpop.f32.mrb[0].mxu0
    %311 = vmatprep.mubr.f32.mxu0 0.0
    %312 = vmatmul.mubr.f32.gmra.mrb[0].mxu0 %v227
    %v313 = vpop.f32.mrb[0].mxu0
    %v314 = vadd.f32 %v210, %v313
    %v315 = vpop.f32.mrb[0].mxu0
    %316 = vmatprep.mubr.f32.mxu0 0.0
    %317 = vmatmul.mubr.f32.gmra.mrb[0].mxu0 %v230
    %v318 = vpop.f32.mrb[0].mxu0
    %v319 = vadd.f32 %v215, %v318
    %v320 = vpop.f32.mrb[0].mxu0
    %321 = vdwg.mxu0
    %v322 = vand.u32 2147483647, %v299
    %v323 = vand.u32 2147483647, %v304
    %v324 = vand.u32 2147483647, %v309
    %v325 = vand.u32 2147483647, %v314
    %v326 = vand.u32 2147483647, %v319
    %v327 = vadd.f32 %v322, %v323
    %v328 = vadd.f32 %v327, %v324
    %v329 = vadd.f32 %v328, %v325
    %v330 = vadd.f32 %v329, %v326
    %v331 = vrot.slane %v330, 4
    %v332 = vadd.f32 %v330, %v331
    %v333 = vrot.slane %v332, 2
    %v334 = vadd.f32 %v332, %v333
    %v335 = vrot.slane %v334, 1
    %v336 = vadd.f32 %v334, %v335
    %v337 = vadd.f32 %v299, %v304
    %v338 = vadd.f32 %v337, %v309
    %v339 = vadd.f32 %v338, %v314
    %v340 = vadd.f32 %v339, %v319
    %v341 = vrot.slane %v340, 4
    %v342 = vadd.f32 %v340, %v341
    %v343 = vrot.slane %v342, 2
    %v344 = vadd.f32 %v342, %v343
    %v345 = vrot.slane %v344, 1
    %v346 = vadd.f32 %v344, %v345
    %v348 = vshra.s32 %v336, 23
    %v349 = vand.u32 %v348, 255
    %v350 = vsub.s32 %v349, 127
    %v351 = vand.u32 %v336, 8388607
    %vm352 = vcmp.eq.s32.totalorder %v351, 0
    %v353 = vadd.s32 %v350, 1
    %v354 = vsel %vm352, %v350, %v353
    %vm355 = vcmp.gt.f32.partialorder %v336, 1.0
    %v356 = vsel %vm355, %v354, 0
    %vm357 = vcmp.gt.s32.totalorder %v356, 0
    %v358 = vsel %vm357, %v356, 0
    %vm359 = vcmp.lt.s32.totalorder %v358, 126
    %v360 = vsel %vm359, %v358, 126
    %v361 = vsub.s32 127, %v360
    %v362 = vshll.u32 %v361, 23
    %v364 = vmul.f32 %v346, %v362
    %365 = vst [vmem:[#allocation5] sm:$0x1] %v364
    // Predicated region
    $region18: #{tpu_custom_call.1} parent=1 // pred_check
      _
    $region19: #{tpu_custom_call.1} parent=1 // pred_check_branch
      %367 = sbr.rel (0) target = $region21
    $region20: #{tpu_custom_call.1} parent=1 // pred_region
      %s369 = ssub.s32 16, 16
      %370 = vsyncadd [#allocation4], %s369
      %s372 = sshll.u32 [#allocation5], 4
      %s373 = int_to_ptr.vmem [resolvable:$true] %s372
      %375 = dma.vmem_to_hbm [thread:$0]  %s373, 16, %s3, [#allocation4]
    $region21: #{tpu_custom_call.1} parent=1 // pred_fallthru
      _
    // Predicated region
    $region22: #{tpu_custom_call.1} parent=1 // pred_check
      _
    $region23: #{tpu_custom_call.1} parent=1 // pred_check_branch
      %377 = sbr.rel (0) target = $region25
    $region24: #{tpu_custom_call.1} parent=1 // pred_region
      %378 = dma.done [#allocation4], 16
    $region25: #{tpu_custom_call.1} parent=1 // pred_fallthru
      _
    %379 = vsyncpa [#allocation3], 1
    %380 = vsyncpa [#allocation4], 1

</llo_original>
